<compile_context>
chip_gen: v6e
topology: v6e:2x2x1
jax: 0.10.0
libtpu: 0.0.40
codegen_flags: <defaults>
</compile_context>

<pallas_src>
import jax
import jax.numpy as jnp
from jax import lax
from jax.experimental import pallas as pl
from jax.experimental.pallas import tpu as pltpu

C_IN = 3
C_OUT = 8
EPS = 1e-5                 # BatchNorm2d default eps
N_BRANCH = 6               # branch k reads x1 if k is even, x2 if k is odd
LANE_TILE_CAP = 16384      # pass-2 lanes per grid step (review: far above 512)


def _round_up(x, m):
    return (x + m - 1) // m * m


# --------------------------------------------------------------------------- #
# Pass 1: per-batch first/second moments of each input over the un-padded
# spatial positions.  One grid step per batch element ("parallel" -> megacore
# on v7x); second moments go through the otherwise-idle MXU.
# --------------------------------------------------------------------------- #
def _stats_kernel(x1_ref, x2_ref, sxx_ref, sx_ref):
    for j, x_ref in ((0, x1_ref), (1, x2_ref)):
        x = x_ref[0]                                            # (C_IN, H*W) lane-dense
        sxx_ref[0, j] = lax.dot_general(                        # x @ x.T (contract lanes)
            x, x, (((1,), (1,)), ((), ())),
            preferred_element_type=jnp.float32)
        sx_ref[0, j] = jnp.sum(x, axis=1, keepdims=True)        # (C_IN, 1)


# --------------------------------------------------------------------------- #
# Pass 2: folded per-branch affines + elementwise combine.
#   y = Wx1 @ x1 + Wx2 @ x2 + d      (24, T) via two MXU matmuls
#   out = y[0:8] * y[8:16] + y[16:24]
# --------------------------------------------------------------------------- #
def _apply_kernel(wcat_ref, d_ref, x1_ref, x2_ref, o_ref):
    x1 = x1_ref[0]                                              # (C_IN, T)
    x2 = x2_ref[0]
    y = (jnp.dot(wcat_ref[0], x1, preferred_element_type=jnp.float32)
         + jnp.dot(wcat_ref[1], x2, preferred_element_type=jnp.float32)
         + d_ref[...])                                          # (3*C_OUT, T)
    p = y[0:C_OUT]
    q = y[C_OUT:2 * C_OUT]
    r = y[2 * C_OUT:3 * C_OUT]
    o_ref[0] = p * q + r


@jax.jit
def model_forward(x1, x2, W, b, gamma, beta):
    x1 = x1.astype(jnp.float32)
    x2 = x2.astype(jnp.float32)
    N, _, H, Wd = x1.shape
    Hp, Wp = H + 2, Wd + 2
    HW = H * Wd                          # un-padded spatial size
    S = Hp * Wp                          # padded spatial size (conv padding=1)
    Npos = float(N * S)                  # BN position count (incl. border rows)

    # ---------------- pass 1: per-batch moment accumulation --------------------
    x1u = x1.reshape(N, C_IN, HW)        # free reshape of the original input
    x2u = x2.reshape(N, C_IN, HW)
    sxx_nb, sx_nb = pl.pallas_call(
        _stats_kernel,
        out_shape=(jax.ShapeDtypeStruct((N, 2, C_IN, C_IN), jnp.float32),
                   jax.ShapeDtypeStruct((N, 2, C_IN, 1), jnp.float32)),
        grid=(N,),
        in_specs=[pl.BlockSpec((1, C_IN, HW), lambda n: (n, 0, 0)),
                  pl.BlockSpec((1, C_IN, HW), lambda n: (n, 0, 0))],
        out_specs=(pl.BlockSpec((1, 2, C_IN, C_IN), lambda n: (n, 0, 0, 0)),
                   pl.BlockSpec((1, 2, C_IN, 1), lambda n: (n, 0, 0, 0))),
        compiler_params=pltpu.CompilerParams(
            dimension_semantics=("parallel",),
            vmem_limit_bytes=32 * 1024 * 1024),
    )(x1u, x2u)

    # -------- finalize: fold conv + BN(batch stats) into one affine per branch --
    sxx = jnp.sum(sxx_nb, axis=0)                                # (2, 3, 3)
    sx = jnp.sum(sx_nb, axis=0)[..., 0]                          # (2, 3)
    m = sx / Npos                                                # per-input mean of x
    cov = sxx / Npos - m[:, :, None] * m[:, None, :]             # centered, stable

    A_list, c_list = [], []
    for k in range(N_BRANCH):
        src = k % 2                      # even branches read x1, odd read x2
        Wk, bk = W[k], b[k]              # (8, 3), (8,)
        mean_y = Wk @ m[src] + bk
        var_y = jnp.einsum('ci,ij,cj->c', Wk, cov[src], Wk)      # bias drops out
        scale = gamma[k] * lax.rsqrt(var_y + EPS)
        A_list.append(scale[:, None] * Wk)                       # folded weight
        c_list.append(beta[k] + scale * (bk - mean_y))           # folded bias

    zero = jnp.zeros((C_OUT, C_IN), jnp.float32)
    wx1 = jnp.concatenate([A_list[0] + A_list[2], zero, A_list[4]], axis=0)
    wx2 = jnp.concatenate([A_list[1], A_list[3], A_list[5]], axis=0)
    wcat = jnp.stack([wx1, wx2]).astype(jnp.float32)             # (2, 24, 3)
    dvec = jnp.concatenate([c_list[0] + c_list[1] + c_list[2],
                            c_list[3],
                            c_list[4] + c_list[5]])[:, None].astype(jnp.float32)

    # ---------------- pass 2: affine apply + combine (parallel grid) -----------
    def prep(x):
        # conv padding=1 (NCHW preserved), flatten spatial.  Single pad; the lane
        # tail of the last block is handled by Pallas masking (no tail pad).
        return jnp.pad(x, ((0, 0), (0, 0), (1, 1), (1, 1))).reshape(N, C_IN, S)

    x1f = prep(x1)
    x2f = prep(x2)

    T = min(LANE_TILE_CAP, _round_up(S, 128))    # big lane-dense tile
    nt = pl.cdiv(S, T)                           # last block may be partial (masked)

    out = pl.pallas_call(
        _apply_kernel,
        out_shape=jax.ShapeDtypeStruct((N, C_OUT, S), jnp.float32),
        grid=(N, nt),
        in_specs=[pl.BlockSpec((2, 3 * C_OUT, C_IN), lambda n, t: (0, 0, 0)),
                  pl.BlockSpec((3 * C_OUT, 1), lambda n, t: (0, 0)),
                  pl.BlockSpec((1, C_IN, T), lambda n, t: (n, 0, t)),
                  pl.BlockSpec((1, C_IN, T), lambda n, t: (n, 0, t))],
        out_specs=pl.BlockSpec((1, C_OUT, T), lambda n, t: (n, 0, t)),
        compiler_params=pltpu.CompilerParams(
            dimension_semantics=("parallel", "parallel"),
            vmem_limit_bytes=32 * 1024 * 1024),
    )(wcat, dvec, x1f, x2f)

    return out.reshape(N, C_OUT, Hp, Wp)         # already NCHW -- free reshape


# --------------------------------------------------------------------------- #
# Pure-JAX reference (independent layout & direct (y-mean)^2 variance).
# --------------------------------------------------------------------------- #
def ref_forward(x1, x2, W, b, gamma, beta):
    def flat(x):
        xp = jnp.pad(x, ((0, 0), (0, 0), (1, 1), (1, 1)))
        return jnp.transpose(xp, (0, 2, 3, 1)).reshape(-1, x.shape[1])

    x1f, x2f = flat(x1), flat(x2)

    def branch(xf, k):
        y = xf @ W[k].T + b[k]                       # (R, 8)
        mean = jnp.mean(y, axis=0)
        var = jnp.mean((y - mean) ** 2, axis=0)
        return gamma[k] * (y - mean) * lax.rsqrt(var + EPS) + beta[k]

    v3 = branch(x1f, 0) + branch(x2f, 1)
    v4 = v3 + branch(x1f, 2)
    v5 = v4 * branch(x2f, 3)
    v6 = v5 + branch(x1f, 4)
    v7 = v6 + branch(x2f, 5)
    N, _, H, Wd = x1.shape
    return jnp.transpose(v7.reshape(N, H + 2, Wd + 2, C_OUT), (0, 3, 1, 2))


if __name__ == "__main__":
    key = jax.random.PRNGKey(0)
    k1, k2, k3, k4, k5, k6 = jax.random.split(key, 6)

    x1 = jax.random.normal(k1, (2, 3, 16, 16), jnp.float32)
    x2 = jax.random.normal(k2, (2, 3, 16, 16), jnp.float32)

    W = jax.random.normal(k3, (N_BRANCH, C_OUT, C_IN), jnp.float32) * 0.5
    b = jax.random.normal(k4, (N_BRANCH, C_OUT), jnp.float32) * 0.1
    gamma = 1.0 + 0.1 * jax.random.normal(k5, (N_BRANCH, C_OUT), jnp.float32)
    beta = 0.1 * jax.random.normal(k6, (N_BRANCH, C_OUT), jnp.float32)

    out = jax.block_until_ready(model_forward(x1, x2, W, b, gamma, beta))
    ref = jax.block_until_ready(ref_forward(x1, x2, W, b, gamma, beta))

    assert out.shape == (2, C_OUT, 18, 18), out.shape
    err = float(jnp.max(jnp.abs(out - ref)))
    assert jnp.allclose(out, ref, atol=1e-2, rtol=1e-2), f"mismatch vs ref: {err}"
    print("KERNEL_OK")
</pallas_src>

<mosaic_0001>
module attributes {stable_mosaic.version = 11 : i64} {
  func.func @_stats_kernel(%arg0: i32, %arg1: memref<1x3x256xf32, #tpu.memory_space<vmem>>, %arg2: memref<1x3x256xf32, #tpu.memory_space<vmem>>, %arg3: memref<1x2x3x3xf32, #tpu.memory_space<vmem>>, %arg4: memref<1x2x3x1xf32, #tpu.memory_space<vmem>>) attributes {dimension_semantics = [#tpu.dimension_semantics<parallel>], iteration_bounds = array<i64: 2>, scalar_prefetch = 0 : i64, scratch_operands = 0 : i64, tpu.core_type = #tpu.core_type<tc>, window_params = [{transform_indices = @transform_0, window_bounds = array<i64: 1, 3, 256>}, {transform_indices = @transform_1, window_bounds = array<i64: 1, 3, 256>}, {transform_indices = @transform_2, window_bounds = array<i64: 1, 2, 3, 3>}, {transform_indices = @transform_3, window_bounds = array<i64: 1, 2, 3, 1>}]} {
    %c0 = arith.constant 0 : index
    %c0_0 = arith.constant 0 : index
    %c0_1 = arith.constant 0 : index
    %0 = vector.load %arg1[%c0, %c0_0, %c0_1] : memref<1x3x256xf32, #tpu.memory_space<vmem>>, vector<1x3x256xf32>
    %1 = vector.shape_cast %0 : vector<1x3x256xf32> to vector<3x256xf32>
    %cst = arith.constant dense<0.000000e+00> : vector<3x3xf32>
    %2 = tpu.matmul %1, %1, %cst {dimension_numbers = #tpu.dot_dimension_numbers<[1], [1], [0], [0], [0, 0, 1, 0], [], []>} : vector<3x256xf32>, vector<3x256xf32>, vector<3x3xf32> -> vector<3x3xf32>
    %c0_2 = arith.constant 0 : index
    %c0_3 = arith.constant 0 : index
    %c0_4 = arith.constant 0 : index
    %c0_5 = arith.constant 0 : index
    %3 = vector.load %arg3[%c0_2, %c0_3, %c0_4, %c0_5] : memref<1x2x3x3xf32, #tpu.memory_space<vmem>>, vector<1x1x3x3xf32>
    %4 = vector.shape_cast %3 : vector<1x1x3x3xf32> to vector<3x3xf32>
    %5 = vector.shape_cast %2 : vector<3x3xf32> to vector<1x1x3x3xf32>
    tpu.vector_store %arg3[%c0_2, %c0_3, %c0_4, %c0_5], %5 {strides = array<i32>} : memref<1x2x3x3xf32, #tpu.memory_space<vmem>>, vector<1x1x3x3xf32>,
    %cst_6 = arith.constant dense<0.000000e+00> : vector<3xf32>
    %6 = vector.multi_reduction <add>, %1, %cst_6 [1] : vector<3x256xf32> to vector<3xf32>
    %7 = vector.shape_cast %6 : vector<3xf32> to vector<3x1xf32>
    %c0_7 = arith.constant 0 : index
    %c0_8 = arith.constant 0 : index
    %c0_9 = arith.constant 0 : index
    %c0_10 = arith.constant 0 : index
    %8 = vector.load %arg4[%c0_7, %c0_8, %c0_9, %c0_10] : memref<1x2x3x1xf32, #tpu.memory_space<vmem>>, vector<1x1x3x1xf32>
    %9 = vector.shape_cast %8 : vector<1x1x3x1xf32> to vector<3x1xf32>
    %10 = vector.shape_cast %7 : vector<3x1xf32> to vector<1x1x3x1xf32>
    tpu.vector_store %arg4[%c0_7, %c0_8, %c0_9, %c0_10], %10 {strides = array<i32>} : memref<1x2x3x1xf32, #tpu.memory_space<vmem>>, vector<1x1x3x1xf32>,
    %c0_11 = arith.constant 0 : index
    %c0_12 = arith.constant 0 : index
    %c0_13 = arith.constant 0 : index
    %11 = vector.load %arg2[%c0_11, %c0_12, %c0_13] : memref<1x3x256xf32, #tpu.memory_space<vmem>>, vector<1x3x256xf32>
    %12 = vector.shape_cast %11 : vector<1x3x256xf32> to vector<3x256xf32>
    %cst_14 = arith.constant dense<0.000000e+00> : vector<3x3xf32>
    %13 = tpu.matmul %12, %12, %cst_14 {dimension_numbers = #tpu.dot_dimension_numbers<[1], [1], [0], [0], [0, 0, 1, 0], [], []>} : vector<3x256xf32>, vector<3x256xf32>, vector<3x3xf32> -> vector<3x3xf32>
    %c0_15 = arith.constant 0 : index
    %c1 = arith.constant 1 : index
    %c0_16 = arith.constant 0 : index
    %c0_17 = arith.constant 0 : index
    %14 = vector.load %arg3[%c0_15, %c1, %c0_16, %c0_17] : memref<1x2x3x3xf32, #tpu.memory_space<vmem>>, vector<1x1x3x3xf32>
    %15 = vector.shape_cast %14 : vector<1x1x3x3xf32> to vector<3x3xf32>
    %16 = vector.shape_cast %13 : vector<3x3xf32> to vector<1x1x3x3xf32>
    tpu.vector_store %arg3[%c0_15, %c1, %c0_16, %c0_17], %16 {strides = array<i32>} : memref<1x2x3x3xf32, #tpu.memory_space<vmem>>, vector<1x1x3x3xf32>,
    %cst_18 = arith.constant dense<0.000000e+00> : vector<3xf32>
    %17 = vector.multi_reduction <add>, %12, %cst_18 [1] : vector<3x256xf32> to vector<3xf32>
    %18 = vector.shape_cast %17 : vector<3xf32> to vector<3x1xf32>
    %c0_19 = arith.constant 0 : index
    %c1_20 = arith.constant 1 : index
    %c0_21 = arith.constant 0 : index
    %c0_22 = arith.constant 0 : index
    %19 = vector.load %arg4[%c0_19, %c1_20, %c0_21, %c0_22] : memref<1x2x3x1xf32, #tpu.memory_space<vmem>>, vector<1x1x3x1xf32>
    %20 = vector.shape_cast %19 : vector<1x1x3x1xf32> to vector<3x1xf32>
    %21 = vector.shape_cast %18 : vector<3x1xf32> to vector<1x1x3x1xf32>
    tpu.vector_store %arg4[%c0_19, %c1_20, %c0_21, %c0_22], %21 {strides = array<i32>} : memref<1x2x3x1xf32, #tpu.memory_space<vmem>>, vector<1x1x3x1xf32>,
    return
  }
  func.func @transform_0(%arg0: i32) -> (i32, i32, i32) {
    %c0_i32 = arith.constant 0 : i32
    %c0_i32_0 = arith.constant 0 : i32
    %c0_i32_1 = arith.constant 0 : i32
    return %arg0, %c0_i32, %c0_i32_0 : i32, i32, i32
  }
  func.func @transform_1(%arg0: i32) -> (i32, i32, i32) {
    %c0_i32 = arith.constant 0 : i32
    %c0_i32_0 = arith.constant 0 : i32
    %c0_i32_1 = arith.constant 0 : i32
    return %arg0, %c0_i32, %c0_i32_0 : i32, i32, i32
  }
  func.func @transform_2(%arg0: i32) -> (i32, i32, i32, i32) {
    %c0_i32 = arith.constant 0 : i32
    %c0_i32_0 = arith.constant 0 : i32
    %c0_i32_1 = arith.constant 0 : i32
    %c0_i32_2 = arith.constant 0 : i32
    return %arg0, %c0_i32, %c0_i32_0, %c0_i32_1 : i32, i32, i32, i32
  }
  func.func @transform_3(%arg0: i32) -> (i32, i32, i32, i32) {
    %c0_i32 = arith.constant 0 : i32
    %c0_i32_0 = arith.constant 0 : i32
    %c0_i32_1 = arith.constant 0 : i32
    %c0_i32_2 = arith.constant 0 : i32
    return %arg0, %c0_i32, %c0_i32_0, %c0_i32_1 : i32, i32, i32, i32
  }
}

module attributes {stable_mosaic.version = 11 : i64} {
  func.func @_apply_kernel(%arg0: i32, %arg1: i32, %arg2: memref<2x24x3xf32, #tpu.memory_space<vmem>>, %arg3: memref<24x1xf32, #tpu.memory_space<vmem>>, %arg4: memref<1x3x384xf32, #tpu.memory_space<vmem>>, %arg5: memref<1x3x384xf32, #tpu.memory_space<vmem>>, %arg6: memref<1x8x384xf32, #tpu.memory_space<vmem>>) attributes {dimension_semantics = [#tpu.dimension_semantics<parallel>, #tpu.dimension_semantics<parallel>], iteration_bounds = array<i64: 2, 1>, scalar_prefetch = 0 : i64, scratch_operands = 0 : i64, tpu.core_type = #tpu.core_type<tc>, window_params = [{pipeline_mode = #tpu.pipeline_mode<synchronous>, transform_indices = @transform_0, window_bounds = array<i64: 2, 24, 3>}, {pipeline_mode = #tpu.pipeline_mode<synchronous>, transform_indices = @transform_1, window_bounds = array<i64: 24, 1>}, {transform_indices = @transform_2, window_bounds = array<i64: 1, 3, 384>}, {transform_indices = @transform_3, window_bounds = array<i64: 1, 3, 384>}, {transform_indices = @transform_4, window_bounds = array<i64: 1, 8, 384>}]} {
    %c0 = arith.constant 0 : index
    %c0_0 = arith.constant 0 : index
    %c0_1 = arith.constant 0 : index
    %0 = vector.load %arg4[%c0, %c0_0, %c0_1] : memref<1x3x384xf32, #tpu.memory_space<vmem>>, vector<1x3x384xf32>
    %1 = vector.shape_cast %0 : vector<1x3x384xf32> to vector<3x384xf32>
    %c0_2 = arith.constant 0 : index
    %c0_3 = arith.constant 0 : index
    %c0_4 = arith.constant 0 : index
    %2 = vector.load %arg5[%c0_2, %c0_3, %c0_4] : memref<1x3x384xf32, #tpu.memory_space<vmem>>, vector<1x3x384xf32>
    %3 = vector.shape_cast %2 : vector<1x3x384xf32> to vector<3x384xf32>
    %c0_5 = arith.constant 0 : index
    %c0_6 = arith.constant 0 : index
    %c0_7 = arith.constant 0 : index
    %4 = vector.load %arg2[%c0_5, %c0_6, %c0_7] : memref<2x24x3xf32, #tpu.memory_space<vmem>>, vector<1x24x3xf32>
    %5 = vector.shape_cast %4 : vector<1x24x3xf32> to vector<24x3xf32>
    %cst = arith.constant dense<0.000000e+00> : vector<24x384xf32>
    %6 = tpu.matmul %5, %1, %cst {dimension_numbers = #tpu.dot_dimension_numbers<[1], [0], [0], [1], [0, 0, 1, 1], [], []>} : vector<24x3xf32>, vector<3x384xf32>, vector<24x384xf32> -> vector<24x384xf32>
    %c1 = arith.constant 1 : index
    %c0_8 = arith.constant 0 : index
    %c0_9 = arith.constant 0 : index
    %7 = vector.load %arg2[%c1, %c0_8, %c0_9] : memref<2x24x3xf32, #tpu.memory_space<vmem>>, vector<1x24x3xf32>
    %8 = vector.shape_cast %7 : vector<1x24x3xf32> to vector<24x3xf32>
    %cst_10 = arith.constant dense<0.000000e+00> : vector<24x384xf32>
    %9 = tpu.matmul %8, %3, %cst_10 {dimension_numbers = #tpu.dot_dimension_numbers<[1], [0], [0], [1], [0, 0, 1, 1], [], []>} : vector<24x3xf32>, vector<3x384xf32>, vector<24x384xf32> -> vector<24x384xf32>
    %10 = arith.addf %6, %9 : vector<24x384xf32>
    %c0_11 = arith.constant 0 : index
    %c0_12 = arith.constant 0 : index
    %11 = vector.load %arg3[%c0_11, %c0_12] : memref<24x1xf32, #tpu.memory_space<vmem>>, vector<24x1xf32>
    %12 = vector.broadcast %11 : vector<24x1xf32> to vector<24x384xf32>
    %13 = arith.addf %10, %12 : vector<24x384xf32>
    %14 = vector.extract_strided_slice %13 {offsets = [0, 0], sizes = [8, 384], strides = [1, 1]} : vector<24x384xf32> to vector<8x384xf32>
    %15 = vector.extract_strided_slice %13 {offsets = [8, 0], sizes = [8, 384], strides = [1, 1]} : vector<24x384xf32> to vector<8x384xf32>
    %16 = vector.extract_strided_slice %13 {offsets = [16, 0], sizes = [8, 384], strides = [1, 1]} : vector<24x384xf32> to vector<8x384xf32>
    %17 = arith.mulf %14, %15 : vector<8x384xf32>
    %18 = arith.addf %17, %16 : vector<8x384xf32>
    %c0_13 = arith.constant 0 : index
    %c0_14 = arith.constant 0 : index
    %c0_15 = arith.constant 0 : index
    %19 = vector.load %arg6[%c0_13, %c0_14, %c0_15] : memref<1x8x384xf32, #tpu.memory_space<vmem>>, vector<1x8x384xf32>
    %20 = vector.shape_cast %19 : vector<1x8x384xf32> to vector<8x384xf32>
    %21 = vector.shape_cast %18 : vector<8x384xf32> to vector<1x8x384xf32>
    tpu.vector_store %arg6[%c0_13, %c0_14, %c0_15], %21 {strides = array<i32>} : memref<1x8x384xf32, #tpu.memory_space<vmem>>, vector<1x8x384xf32>,
    return
  }
  func.func @transform_0(%arg0: i32, %arg1: i32) -> (i32, i32, i32) {
    %c0_i32 = arith.constant 0 : i32
    %c0_i32_0 = arith.constant 0 : i32
    %c0_i32_1 = arith.constant 0 : i32
    %c0_i32_2 = arith.constant 0 : i32
    return %c0_i32, %c0_i32_0, %c0_i32_1 : i32, i32, i32
  }
  func.func @transform_1(%arg0: i32, %arg1: i32) -> (i32, i32) {
    %c0_i32 = arith.constant 0 : i32
    %c0_i32_0 = arith.constant 0 : i32
    %c0_i32_1 = arith.constant 0 : i32
    return %c0_i32, %c0_i32_0 : i32, i32
  }
  func.func @transform_2(%arg0: i32, %arg1: i32) -> (i32, i32, i32) {
    %c0_i32 = arith.constant 0 : i32
    %c0_i32_0 = arith.constant 0 : i32
    return %arg0, %c0_i32, %arg1 : i32, i32, i32
  }
  func.func @transform_3(%arg0: i32, %arg1: i32) -> (i32, i32, i32) {
    %c0_i32 = arith.constant 0 : i32
    %c0_i32_0 = arith.constant 0 : i32
    return %arg0, %c0_i32, %arg1 : i32, i32, i32
  }
  func.func @transform_4(%arg0: i32, %arg1: i32) -> (i32, i32, i32) {
    %c0_i32 = arith.constant 0 : i32
    %c0_i32_0 = arith.constant 0 : i32
    return %arg0, %c0_i32, %arg1 : i32, i32, i32
  }
}

</mosaic_0001>

<llo_original>
// kernel: model_forward.2
$region0: #{model_forward.2}
  #allocation0 [shape = 'u32[]', space=smem, size = 0x4, offset = 0x4, fixed_abs, tag = 'smem constant byte address 0x4 - core index']
  #allocation1 [shape = 'u32[144,128]{1,0:T(1,128)}', space=vmem, size = 0x12000, scoped, tag = 'internal scratch']
  %s0 = inlined_call_operand.vmem [shape: f32[2,3,256], index: 0, kind: input, shape index: {}]
  %s1 = inlined_call_operand.vmem [shape: f32[2,3,256], index: 1, kind: input, shape index: {}]
  %s2 = inlined_call_operand.vmem [shape: f32[2,2,3,3], index: 2, kind: output, shape index: {0}]
  %s3 = inlined_call_operand.vmem [shape: f32[2,2,3,1], index: 3, kind: output, shape index: {1}]
  %4 = xla_tuple %s2, %s3
  %s5 = sld [smem:[#allocation0]]
  $region49: #{model_forward.2} parent=0
    _
  %s7 = ssub.s32 1, %s5
  %s8 = scalar_select 0, %s7, %s5
  loop: start=0, step=1, limit=4
  $region2: #{model_forward.2} parent=0 // loop_pre_header
    _
  $region3: #{model_forward.2} parent=0 // loop_header
    %s10 = sphi 0, %s14
    %p11 = scmp.ge.s32.totalorder %s10, 4
    %s20 = sphi 0, %s22
    %s23 = sphi 0, %s20
    %s24 = sphi 0, %s23
    %s40 = sphi 0, %s24
    %s46 = sphi 0, %s48
    %s49 = sphi 0, %s46
    %s50 = sphi 0, %s49
    %s66 = sphi 0, %s50
    %s72 = sphi 0, %s74
    %s75 = sphi 0, %s72
    %s76 = sphi 0, %s75
    %s92 = sphi 0, %s76
    %s98 = sphi 0, %s100
    %s101 = sphi 0, %s98
    %s102 = sphi 0, %s101
    %s118 = sphi 0, %s102
  $region4: #{model_forward.2} parent=0 // loop_header_branch
    %13 = sbr.rel (%p11) target = $region8
  $region5: #{model_forward.2} parent=0 // loop_body
    %s15 = ssub.s32 %s10, 1
    %s16 = ssub.s32 %s10, 2
    %s17 = sadd.s32 %s10, 1
    %s18 = ssub.s32 %s10, %s17
    %p19 = scmp.eq.s32.totalorder %s18, 0
    %s21 = sadd.s32 %s20, 1
    %s22 = scalar_select %p19, %s20, %s21
    %p25 = pneg %p19
    %p26 = scmp.eq.s32.totalorder %s10, 1
    %p27 = por %p25, %p26
    %p28 = scmp.ne.s32.totalorder %s20, %s23
    %p29 = scmp.eq.s32.totalorder %s10, 0
    %p30 = por %p28, %p29
    %p31 = scmp.ne.s32.totalorder %s20, %s23
    %p32 = scmp.eq.s32.totalorder %s15, 1
    %p33 = por %p31, %p32
    %p34 = scmp.ne.s32.totalorder %s23, %s24
    %p35 = scmp.eq.s32.totalorder %s15, 0
    %p36 = por %p34, %p35
    %p37 = scmp.ne.s32.totalorder %s23, %s24
    %p38 = scmp.eq.s32.totalorder %s16, 1
    %p39 = por %p37, %p38
    %p41 = scmp.ne.s32.totalorder %s24, %s40
    %p42 = scmp.eq.s32.totalorder %s16, 0
    %p43 = por %p41, %p42
    %s44 = ssub.s32 %s10, %s17
    %p45 = scmp.eq.s32.totalorder %s44, 0
    %s47 = sadd.s32 %s46, 1
    %s48 = scalar_select %p45, %s46, %s47
    %p51 = pneg %p45
    %p52 = scmp.eq.s32.totalorder %s10, 1
    %p53 = por %p51, %p52
    %p54 = scmp.ne.s32.totalorder %s46, %s49
    %p55 = scmp.eq.s32.totalorder %s10, 0
    %p56 = por %p54, %p55
    %p57 = scmp.ne.s32.totalorder %s46, %s49
    %p58 = scmp.eq.s32.totalorder %s15, 1
    %p59 = por %p57, %p58
    %p60 = scmp.ne.s32.totalorder %s49, %s50
    %p61 = scmp.eq.s32.totalorder %s15, 0
    %p62 = por %p60, %p61
    %p63 = scmp.ne.s32.totalorder %s49, %s50
    %p64 = scmp.eq.s32.totalorder %s16, 1
    %p65 = por %p63, %p64
    %p67 = scmp.ne.s32.totalorder %s50, %s66
    %p68 = scmp.eq.s32.totalorder %s16, 0
    %p69 = por %p67, %p68
    %s70 = ssub.s32 %s10, %s17
    %p71 = scmp.eq.s32.totalorder %s70, 0
    %s73 = sadd.s32 %s72, 1
    %s74 = scalar_select %p71, %s72, %s73
    %p77 = pneg %p71
    %p78 = scmp.eq.s32.totalorder %s10, 1
    %p79 = por %p77, %p78
    %p80 = scmp.ne.s32.totalorder %s72, %s75
    %p81 = scmp.eq.s32.totalorder %s10, 0
    %p82 = por %p80, %p81
    %p83 = scmp.ne.s32.totalorder %s72, %s75
    %p84 = scmp.eq.s32.totalorder %s15, 1
    %p85 = por %p83, %p84
    %p86 = scmp.ne.s32.totalorder %s75, %s76
    %p87 = scmp.eq.s32.totalorder %s15, 0
    %p88 = por %p86, %p87
    %p89 = scmp.ne.s32.totalorder %s75, %s76
    %p90 = scmp.eq.s32.totalorder %s16, 1
    %p91 = por %p89, %p90
    %p93 = scmp.ne.s32.totalorder %s76, %s92
    %p94 = scmp.eq.s32.totalorder %s16, 0
    %p95 = por %p93, %p94
    %s96 = ssub.s32 %s10, %s17
    %p97 = scmp.eq.s32.totalorder %s96, 0
    %s99 = sadd.s32 %s98, 1
    %s100 = scalar_select %p97, %s98, %s99
    %p103 = pneg %p97
    %p104 = scmp.eq.s32.totalorder %s10, 1
    %p105 = por %p103, %p104
    %p106 = scmp.ne.s32.totalorder %s98, %s101
    %p107 = scmp.eq.s32.totalorder %s10, 0
    %p108 = por %p106, %p107
    %p109 = scmp.ne.s32.totalorder %s98, %s101
    %p110 = scmp.eq.s32.totalorder %s15, 1
    %p111 = por %p109, %p110
    %p112 = scmp.ne.s32.totalorder %s101, %s102
    %p113 = scmp.eq.s32.totalorder %s15, 0
    %p114 = por %p112, %p113
    %p115 = scmp.ne.s32.totalorder %s101, %s102
    %p116 = scmp.eq.s32.totalorder %s16, 1
    %p117 = por %p115, %p116
    %p119 = scmp.ne.s32.totalorder %s102, %s118
    %p120 = scmp.eq.s32.totalorder %s16, 0
    %p121 = por %p119, %p120
    %p122 = scmp.le.s32.totalorder 1, %s10
    %p123 = scmp.lt.s32.totalorder %s10, 3
    %p124 = pnand %p122, %p123
    %p125 = pneg %p124
    // Predicated region
    $region9: #{model_forward.2} parent=5 // pred_check
      _
    $region10: #{model_forward.2} parent=5 // pred_check_branch
      %127 = sbr.rel (%p124) target = $region12
    $region11: #{model_forward.2} parent=5 // pred_region
      %s128 = ssub.s32 %s10, 1
    $region12: #{model_forward.2} parent=5 // pred_fallthru
      _
    %p129 = scmp.lt.s32.totalorder %s10, 2
    // Predicated region
    $region13: #{model_forward.2} parent=5 // pred_check
      %p130 = pneg %p129
    $region14: #{model_forward.2} parent=5 // pred_check_branch
      %132 = sbr.rel (%p130) target = $region16
    $region15: #{model_forward.2} parent=5 // pred_region
      // Predicated region
      $region17: #{model_forward.2} parent=15 // pred_check
        %p133 = pneg %p30
      $region18: #{model_forward.2} parent=15 // pred_check_branch
        %135 = sbr.rel (%p133) target = $region20
      $region19: #{model_forward.2} parent=15 // pred_region
        %p136 = scmp.lt.s32.totalorder %s10, 1
        %s137 = scalar_select %p136, %s10, 1
        %s138 = smul.addr %s137, 2
        %s139 = smul.addr %s138, 4
        %s140 = scalar_lea.vmem %s0, %s139
      $region20: #{model_forward.2} parent=15 // pred_fallthru
        _
      // Predicated region
      $region21: #{model_forward.2} parent=15 // pred_check
        %p141 = pneg %p56
      $region22: #{model_forward.2} parent=15 // pred_check_branch
        %143 = sbr.rel (%p141) target = $region24
      $region23: #{model_forward.2} parent=15 // pred_region
        %p144 = scmp.lt.s32.totalorder %s10, 1
        %s145 = scalar_select %p144, %s10, 1
        %s146 = smul.addr %s145, 2
        %s147 = smul.addr %s146, 4
        %s148 = scalar_lea.vmem %s1, %s147
      $region24: #{model_forward.2} parent=15 // pred_fallthru
        _
    $region16: #{model_forward.2} parent=5 // pred_fallthru
      _
    %p149 = scmp.le.s32.totalorder 1, %s10
    %p150 = scmp.lt.s32.totalorder %s10, 3
    %p151 = pnand %p149, %p150
    %p152 = pneg %p151
    // Predicated region
    $region25: #{model_forward.2} parent=5 // pred_check
      _
    $region26: #{model_forward.2} parent=5 // pred_check_branch
      %154 = sbr.rel (%p151) target = $region28
    $region27: #{model_forward.2} parent=5 // pred_region
      %s155 = ssub.s32 %s10, 1
      %p156 = scmp.lt.s32.totalorder %s15, 1
      %s157 = scalar_select %p156, %s15, 1
      %s158 = smul.addr %s157, 2
      %s159 = smul.addr %s158, 4
      %s160 = scalar_lea.vmem %s0, %s159
      %p161 = pneg %p36
      %p162 = pneg %p33
      %p163 = scmp.lt.s32.totalorder %s15, 1
      %s164 = scalar_select %p163, %s15, 1
      %s165 = smul.addr %s164, 2
      %s166 = smul.addr %s165, 4
      %s167 = scalar_lea.vmem %s1, %s166
      %p168 = pneg %p62
      %p169 = pneg %p59
      %p170 = pneg %p88
      %p171 = pneg %p85
      %p172 = scmp.lt.s32.totalorder %s15, 1
      %s173 = scalar_select %p172, %s15, 1
      %s174 = smul.addr %s173, 2
      %s175 = smul.addr %s174, 4
      %s176 = scalar_lea.vmem %s2, %s175
      %p177 = pneg %p114
      %p178 = pneg %p111
      %p179 = scmp.lt.s32.totalorder %s15, 1
      %s180 = scalar_select %p179, %s15, 1
      %s181 = smul.addr %s180, 2
      %s182 = smul.addr %s181, 4
      %s183 = scalar_lea.vmem %s3, %s182
      %p184 = scmp.lt.s32.totalorder %s15, 1
      %s185 = scalar_select %p184, %s15, 1
      %s186 = smul.addr %s185, 2
      %s187 = smul.addr %s186, 4
      %s188 = scalar_lea.vmem %s0, %s187
      %p189 = scmp.lt.s32.totalorder %s15, 1
      %s190 = scalar_select %p189, %s15, 1
      %s191 = smul.addr %s190, 2
      %s192 = smul.addr %s191, 4
      %s193 = scalar_lea.vmem %s1, %s192
      %p194 = scmp.lt.s32.totalorder %s15, 1
      %s195 = scalar_select %p194, %s15, 1
      %s196 = smul.addr %s195, 2
      %s197 = smul.addr %s196, 4
      %s198 = scalar_lea.vmem %s2, %s197
      %p199 = scmp.lt.s32.totalorder %s15, 1
      %s200 = scalar_select %p199, %s15, 1
      %s201 = smul.addr %s200, 2
      %s202 = smul.addr %s201, 4
      %s203 = scalar_lea.vmem %s3, %s202
      %v204 = vld [vmem:[%s188] sm:$0x77]
      %v206 = vcombine.high %v204, %v204
      %208 = vmatprep.subr.mxu0 0.0
      %209 = vmatpush1.xpose.msra.mxu0 0.0
      %210 = vmatprep.subr.mxu0 0.0
      %211 = vmatpush1.xpose.msra.mxu0 0.0
      %212 = vmatprep.subr.mxu0 0.0
      %213 = vmatpush1.xpose.msra.mxu0 0.0
      %214 = vmatprep.subr.mxu0 0.0
      %215 = vmatpush1.xpose.msra.mxu0 0.0
      %216 = vmatprep.subr.mxu0 0.0
      %217 = vmatpush1.xpose.msra.mxu0 0.0
      %218 = vmatprep.subr.mxu0 0.0
      %219 = vmatpush1.xpose.msra.mxu0 0.0
      %220 = vmatprep.subr.mxu0 0.0
      %221 = vmatpush1.xpose.msra.mxu0 0.0
      %222 = vmatprep.subr.mxu0 0.0
      %223 = vmatpush1.xpose.msra.mxu0 0.0
      %224 = vmatprep.subr.mxu0 0.0
      %225 = vmatpush1.xpose.msra.mxu0 0.0
      %226 = vmatprep.subr.mxu0 0.0
      %227 = vmatpush1.xpose.msra.mxu0 0.0
      %228 = vmatprep.subr.mxu0 0.0
      %229 = vmatpush1.xpose.msra.mxu0 0.0
      %230 = vmatprep.subr.mxu0 0.0
      %231 = vmatpush1.xpose.msra.mxu0 0.0
      %232 = vmatprep.subr.mxu0 0.0
      %233 = vmatpush1.xpose.msra.mxu0 0.0
      %234 = vmatprep.subr.mxu0 0.0
      %235 = vmatpush1.xpose.msra.mxu0 0.0
      %236 = vmatprep.subr.mxu0 0.0
      %237 = vmatpush1.xpose.msra.mxu0 0.0
      %238 = vmatprep.subr.mxu0 %v206
      %239 = vmatpush1.xpose.msra.mxu0 %v204
      %240 = vmatprep.subr.mxu0 0.0
      %241 = vmatpush2.xpose.msra.mxu0 0.0
      %242 = vmatprep.subr.mxu0 0.0
      %243 = vmatpush2.xpose.msra.mxu0 0.0
      %244 = vmatprep.subr.mxu0 0.0
      %245 = vmatpush2.xpose.msra.mxu0 0.0
      %246 = vmatprep.subr.mxu0 0.0
      %247 = vmatpush2.xpose.msra.mxu0 0.0
      %248 = vmatprep.subr.mxu0 0.0
      %249 = vmatpush2.xpose.msra.mxu0 0.0
      %250 = vmatprep.subr.mxu0 0.0
      %251 = vmatpush2.xpose.msra.mxu0 0.0
      %252 = vmatprep.subr.mxu0 0.0
      %253 = vmatpush2.xpose.msra.mxu0 0.0
      %254 = vmatprep.subr.mxu0 0.0
      %255 = vmatpush2.xpose.msra.mxu0 0.0
      %256 = vmatprep.subr.mxu0 0.0
      %257 = vmatpush2.xpose.msra.mxu0 0.0
      %258 = vmatprep.subr.mxu0 0.0
      %259 = vmatpush2.xpose.msra.mxu0 0.0
      %260 = vmatprep.subr.mxu0 0.0
      %261 = vmatpush2.xpose.msra.mxu0 0.0
      %262 = vmatprep.subr.mxu0 0.0
      %263 = vmatpush2.xpose.msra.mxu0 0.0
      %264 = vmatprep.subr.mxu0 0.0
      %265 = vmatpush2.xpose.msra.mxu0 0.0
      %266 = vmatprep.subr.mxu0 0.0
      %267 = vmatpush2.xpose.msra.mxu0 0.0
      %268 = vmatprep.subr.mxu0 0.0
      %269 = vmatpush2.xpose.msra.mxu0 0.0
      %270 = vmatprep.subr.mxu0 0.0
      %271 = vmatpush2.xpose.msra.mxu0 0.0
      %272 = vmatprep.mubr.f32.mxu0 %v206
      %273 = vmatmul.mubr.f32.gmra.mxu0 %v204
      %v274 = vpop.f32.mrf.mxu0
      %v275 = vadd.f32 0.0, %v274
      %v276 = vpop.f32.mrf.mxu0
      %277 = vdwg.mxu0
      %vm278 = vcmask 18432
      %279 = vst.msk [vmem:[%s198] sm:$0x7] %vm278, %v275
      %vm280 = vcmask 1042432
      %v281 = vsel %vm280, %v204, 0.0
      %v282 = vsel %vm280, %v206, 0.0
      %v283 = vadd.f32 %v281, %v282
      %284 = vadd.xlane.f32.xlu0 %v283
      %v285 = vpop.xlane.xlu0 %284
      %vm286 = vcmask 2048
      %287 = vst.msk [vmem:[%s203] sm:$0x7] %vm286, %v285
      %v288 = vld [vmem:[%s193] sm:$0x77]
      %v290 = vcombine.high %v288, %v288
      %292 = vmatprep.subr.mxu0 0.0
      %293 = vmatpush1.xpose.msra.mxu0 0.0
      %294 = vmatprep.subr.mxu0 0.0
      %295 = vmatpush1.xpose.msra.mxu0 0.0
      %296 = vmatprep.subr.mxu0 0.0
      %297 = vmatpush1.xpose.msra.mxu0 0.0
      %298 = vmatprep.subr.mxu0 0.0
      %299 = vmatpush1.xpose.msra.mxu0 0.0
      %300 = vmatprep.subr.mxu0 0.0
      %301 = vmatpush1.xpose.msra.mxu0 0.0
      %302 = vmatprep.subr.mxu0 0.0
      %303 = vmatpush1.xpose.msra.mxu0 0.0
      %304 = vmatprep.subr.mxu0 0.0
      %305 = vmatpush1.xpose.msra.mxu0 0.0
      %306 = vmatprep.subr.mxu0 0.0
      %307 = vmatpush1.xpose.msra.mxu0 0.0
      %308 = vmatprep.subr.mxu0 0.0
      %309 = vmatpush1.xpose.msra.mxu0 0.0
      %310 = vmatprep.subr.mxu0 0.0
      %311 = vmatpush1.xpose.msra.mxu0 0.0
      %312 = vmatprep.subr.mxu0 0.0
      %313 = vmatpush1.xpose.msra.mxu0 0.0
      %314 = vmatprep.subr.mxu0 0.0
      %315 = vmatpush1.xpose.msra.mxu0 0.0
      %316 = vmatprep.subr.mxu0 0.0
      %317 = vmatpush1.xpose.msra.mxu0 0.0
      %318 = vmatprep.subr.mxu0 0.0
      %319 = vmatpush1.xpose.msra.mxu0 0.0
      %320 = vmatprep.subr.mxu0 0.0
      %321 = vmatpush1.xpose.msra.mxu0 0.0
      %322 = vmatprep.subr.mxu0 %v290
      %323 = vmatpush1.xpose.msra.mxu0 %v288
      %324 = vmatprep.subr.mxu0 0.0
      %325 = vmatpush2.xpose.msra.mxu0 0.0
      %326 = vmatprep.subr.mxu0 0.0
      %327 = vmatpush2.xpose.msra.mxu0 0.0
      %328 = vmatprep.subr.mxu0 0.0
      %329 = vmatpush2.xpose.msra.mxu0 0.0
      %330 = vmatprep.subr.mxu0 0.0
      %331 = vmatpush2.xpose.msra.mxu0 0.0
      %332 = vmatprep.subr.mxu0 0.0
      %333 = vmatpush2.xpose.msra.mxu0 0.0
      %334 = vmatprep.subr.mxu0 0.0
      %335 = vmatpush2.xpose.msra.mxu0 0.0
      %336 = vmatprep.subr.mxu0 0.0
      %337 = vmatpush2.xpose.msra.mxu0 0.0
      %338 = vmatprep.subr.mxu0 0.0
      %339 = vmatpush2.xpose.msra.mxu0 0.0
      %340 = vmatprep.subr.mxu0 0.0
      %341 = vmatpush2.xpose.msra.mxu0 0.0
      %342 = vmatprep.subr.mxu0 0.0
      %343 = vmatpush2.xpose.msra.mxu0 0.0
      %344 = vmatprep.subr.mxu0 0.0
      %345 = vmatpush2.xpose.msra.mxu0 0.0
      %346 = vmatprep.subr.mxu0 0.0
      %347 = vmatpush2.xpose.msra.mxu0 0.0
      %348 = vmatprep.subr.mxu0 0.0
      %349 = vmatpush2.xpose.msra.mxu0 0.0
      %350 = vmatprep.subr.mxu0 0.0
      %351 = vmatpush2.xpose.msra.mxu0 0.0
      %352 = vmatprep.subr.mxu0 0.0
      %353 = vmatpush2.xpose.msra.mxu0 0.0
      %354 = vmatprep.subr.mxu0 0.0
      %355 = vmatpush2.xpose.msra.mxu0 0.0
      %356 = vmatprep.mubr.f32.mxu0 %v290
      %357 = vmatmul.mubr.f32.gmra.mxu0 %v288
      %v358 = vpop.f32.mrf.mxu0
      %v359 = vadd.f32 0.0, %v358
      %v360 = vpop.f32.mrf.mxu0
      %361 = vdwg.mxu0
      %s362 = scalar_lea.vmem %s198, 4
      %363 = vst.msk [vmem:[%s362] sm:$0x7] %vm278, %v359
      %v364 = vsel %vm280, %v288, 0.0
      %v365 = vsel %vm280, %v290, 0.0
      %v366 = vadd.f32 %v364, %v365
      %367 = vadd.xlane.f32.xlu0 %v366
      %v368 = vpop.xlane.xlu0 %367
      %s369 = scalar_lea.vmem %s203, 4
      %370 = vst.msk [vmem:[%s369] sm:$0x7] %vm286, %v368
      %p371 = scmp.lt.s32.totalorder %s15, 1
      %s372 = scalar_select %p371, %s15, 1
      %s373 = smul.addr %s372, 2
      %s374 = smul.addr %s373, 4
      %s375 = scalar_lea.vmem %s2, %s374
      %p376 = scmp.lt.s32.totalorder %s15, 1
      %s377 = scalar_select %p376, %s15, 1
      %s378 = smul.addr %s377, 2
      %s379 = smul.addr %s378, 4
      %s380 = scalar_lea.vmem %s3, %s379
      // Predicated region
      $region29: #{model_forward.2} parent=27 // pred_check
        %p381 = pneg %p85
      $region30: #{model_forward.2} parent=27 // pred_check_branch
        %383 = sbr.rel (%p381) target = $region32
      $region31: #{model_forward.2} parent=27 // pred_region
        _
      $region32: #{model_forward.2} parent=27 // pred_fallthru
        _
      // Predicated region
      $region33: #{model_forward.2} parent=27 // pred_check
        %p384 = pneg %p111
      $region34: #{model_forward.2} parent=27 // pred_check_branch
        %386 = sbr.rel (%p384) target = $region36
      $region35: #{model_forward.2} parent=27 // pred_region
        _
      $region36: #{model_forward.2} parent=27 // pred_fallthru
        _
    $region28: #{model_forward.2} parent=5 // pred_fallthru
      _
    %p387 = scmp.le.s32.totalorder 2, %s10
    // Predicated region
    $region37: #{model_forward.2} parent=5 // pred_check
      %p388 = pneg %p387
    $region38: #{model_forward.2} parent=5 // pred_check_branch
      %390 = sbr.rel (%p388) target = $region40
    $region39: #{model_forward.2} parent=5 // pred_region
      %s391 = ssub.s32 %s10, 2
      // Predicated region
      $region41: #{model_forward.2} parent=39 // pred_check
        %p392 = pneg %p91
      $region42: #{model_forward.2} parent=39 // pred_check_branch
        %394 = sbr.rel (%p392) target = $region44
      $region43: #{model_forward.2} parent=39 // pred_region
        %p395 = scmp.lt.s32.totalorder %s16, 1
        %s396 = scalar_select %p395, %s16, 1
        %s397 = smul.addr %s396, 2
        %s398 = smul.addr %s397, 4
        %s399 = scalar_lea.vmem %s2, %s398
      $region44: #{model_forward.2} parent=39 // pred_fallthru
        _
      // Predicated region
      $region45: #{model_forward.2} parent=39 // pred_check
        %p400 = pneg %p117
      $region46: #{model_forward.2} parent=39 // pred_check_branch
        %402 = sbr.rel (%p400) target = $region48
      $region47: #{model_forward.2} parent=39 // pred_region
        %p403 = scmp.lt.s32.totalorder %s16, 1
        %s404 = scalar_select %p403, %s16, 1
        %s405 = smul.addr %s404, 2
        %s406 = smul.addr %s405, 4
        %s407 = scalar_lea.vmem %s3, %s406
      $region48: #{model_forward.2} parent=39 // pred_fallthru
        _
    $region40: #{model_forward.2} parent=5 // pred_fallthru
      _
  $region6: #{model_forward.2} parent=0 // loop_footer
    %s14 = sadd.s32 1, %s10
  $region7: #{model_forward.2} parent=0 // loop_footer_branch
    %9 = sbr.rel target = $region3
  $region8: #{model_forward.2} parent=0 // loop_exit
    _

// kernel: model_forward.3
$region0: #{model_forward.3}
  #allocation0 [shape = 'u32[]', space=smem, size = 0x4, offset = 0x4, fixed_abs, tag = 'smem constant byte address 0x4 - core index']
  #allocation1 [shape = 'u32[144,128]{1,0:T(1,128)}', space=vmem, size = 0x12000, scoped, tag = 'internal scratch']
  %s0 = inlined_call_operand.vmem [shape: f32[2,24,3], index: 0, kind: input, shape index: {}]
  %s1 = inlined_call_operand.vmem [shape: f32[24,1], index: 1, kind: input, shape index: {}]
  %s2 = inlined_call_operand.vmem [shape: f32[2,3,324], index: 2, kind: input, shape index: {}]
  %s3 = inlined_call_operand.vmem [shape: f32[2,3,324], index: 3, kind: input, shape index: {}]
  %s4 = inlined_call_operand.vmem [shape: f32[2,8,324], index: 4, kind: output, shape index: {}]
  %s5 = sld [smem:[#allocation0]]
  $region49: #{model_forward.3} parent=0
    _
  %s7 = ssub.s32 1, %s5
  %s8 = scalar_select 0, %s7, %s5
  loop: start=0, step=1, limit=4
  $region2: #{model_forward.3} parent=0 // loop_pre_header
    _
  $region3: #{model_forward.3} parent=0 // loop_header
    %s10 = sphi 0, %s14
    %p11 = scmp.ge.s32.totalorder %s10, 4
    %s17 = sphi 0, %s29
    %s18 = sphi 0, %s25
    %s19 = sphi 0, %s17
    %s20 = sphi 0, %s18
    %s21 = sphi 0, %s19
    %s22 = sphi 0, %s20
    %s30 = sphi 0, %s30
    %s32 = sphi 0, %s30
    %s33 = sphi 0, %s32
    %s47 = sphi 0, %s33
    %s51 = sphi 0, %s51
    %s53 = sphi 0, %s51
    %s54 = sphi 0, %s53
    %s68 = sphi 0, %s54
    %s76 = sphi 0, %s78
    %s79 = sphi 0, %s76
    %s80 = sphi 0, %s79
    %s96 = sphi 0, %s80
    %s104 = sphi 0, %s106
    %s107 = sphi 0, %s104
    %s108 = sphi 0, %s107
    %s124 = sphi 0, %s108
    %s132 = sphi 0, %s134
    %s135 = sphi 0, %s132
    %s136 = sphi 0, %s135
    %s152 = sphi 0, %s136
  $region4: #{model_forward.3} parent=0 // loop_header_branch
    %13 = sbr.rel (%p11) target = $region8
  $region5: #{model_forward.3} parent=0 // loop_body
    %s15 = ssub.s32 %s10, 1
    %s16 = ssub.s32 %s10, 2
    %s23 = sadd.s32 1, %s18
    %p24 = scmp.ge.s32.totalorder %s23, 1
    %s25 = scalar_select %p24, 0, %s23
    %s26 = sadd.s32 1, %s17
    %s27 = scalar_select %p24, %s26, %s17
    %p28 = scmp.ge.s32.totalorder %s27, 2
    %s29 = scalar_select %p28, 0, %s27
    %s31 = sadd.s32 %s30, 1
    %p34 = scmp.eq.s32.totalorder %s10, 1
    %p35 = scmp.ne.s32.totalorder %s30, %s32
    %p36 = scmp.eq.s32.totalorder %s10, 0
    %p37 = por %p35, %p36
    %p38 = scmp.ne.s32.totalorder %s30, %s32
    %p39 = scmp.eq.s32.totalorder %s15, 1
    %p40 = por %p38, %p39
    %p41 = scmp.ne.s32.totalorder %s32, %s33
    %p42 = scmp.eq.s32.totalorder %s15, 0
    %p43 = por %p41, %p42
    %p44 = scmp.ne.s32.totalorder %s32, %s33
    %p45 = scmp.eq.s32.totalorder %s16, 1
    %p46 = por %p44, %p45
    %p48 = scmp.ne.s32.totalorder %s33, %s47
    %p49 = scmp.eq.s32.totalorder %s16, 0
    %p50 = por %p48, %p49
    %s52 = sadd.s32 %s51, 1
    %p55 = scmp.eq.s32.totalorder %s10, 1
    %p56 = scmp.ne.s32.totalorder %s51, %s53
    %p57 = scmp.eq.s32.totalorder %s10, 0
    %p58 = por %p56, %p57
    %p59 = scmp.ne.s32.totalorder %s51, %s53
    %p60 = scmp.eq.s32.totalorder %s15, 1
    %p61 = por %p59, %p60
    %p62 = scmp.ne.s32.totalorder %s53, %s54
    %p63 = scmp.eq.s32.totalorder %s15, 0
    %p64 = por %p62, %p63
    %p65 = scmp.ne.s32.totalorder %s53, %s54
    %p66 = scmp.eq.s32.totalorder %s16, 1
    %p67 = por %p65, %p66
    %p69 = scmp.ne.s32.totalorder %s54, %s68
    %p70 = scmp.eq.s32.totalorder %s16, 0
    %p71 = por %p69, %p70
    %s72 = ssub.s32 %s17, %s29
    %s73 = ssub.s32 %s18, %s25
    %s74 = sor.u32 %s72, %s73
    %p75 = scmp.eq.s32.totalorder %s74, 0
    %s77 = sadd.s32 %s76, 1
    %s78 = scalar_select %p75, %s76, %s77
    %p81 = pneg %p75
    %p82 = scmp.eq.s32.totalorder %s10, 1
    %p83 = por %p81, %p82
    %p84 = scmp.ne.s32.totalorder %s76, %s79
    %p85 = scmp.eq.s32.totalorder %s10, 0
    %p86 = por %p84, %p85
    %p87 = scmp.ne.s32.totalorder %s76, %s79
    %p88 = scmp.eq.s32.totalorder %s15, 1
    %p89 = por %p87, %p88
    %p90 = scmp.ne.s32.totalorder %s79, %s80
    %p91 = scmp.eq.s32.totalorder %s15, 0
    %p92 = por %p90, %p91
    %p93 = scmp.ne.s32.totalorder %s79, %s80
    %p94 = scmp.eq.s32.totalorder %s16, 1
    %p95 = por %p93, %p94
    %p97 = scmp.ne.s32.totalorder %s80, %s96
    %p98 = scmp.eq.s32.totalorder %s16, 0
    %p99 = por %p97, %p98
    %s100 = ssub.s32 %s17, %s29
    %s101 = ssub.s32 %s18, %s25
    %s102 = sor.u32 %s100, %s101
    %p103 = scmp.eq.s32.totalorder %s102, 0
    %s105 = sadd.s32 %s104, 1
    %s106 = scalar_select %p103, %s104, %s105
    %p109 = pneg %p103
    %p110 = scmp.eq.s32.totalorder %s10, 1
    %p111 = por %p109, %p110
    %p112 = scmp.ne.s32.totalorder %s104, %s107
    %p113 = scmp.eq.s32.totalorder %s10, 0
    %p114 = por %p112, %p113
    %p115 = scmp.ne.s32.totalorder %s104, %s107
    %p116 = scmp.eq.s32.totalorder %s15, 1
    %p117 = por %p115, %p116
    %p118 = scmp.ne.s32.totalorder %s107, %s108
    %p119 = scmp.eq.s32.totalorder %s15, 0
    %p120 = por %p118, %p119
    %p121 = scmp.ne.s32.totalorder %s107, %s108
    %p122 = scmp.eq.s32.totalorder %s16, 1
    %p123 = por %p121, %p122
    %p125 = scmp.ne.s32.totalorder %s108, %s124
    %p126 = scmp.eq.s32.totalorder %s16, 0
    %p127 = por %p125, %p126
    %s128 = ssub.s32 %s17, %s29
    %s129 = ssub.s32 %s18, %s25
    %s130 = sor.u32 %s128, %s129
    %p131 = scmp.eq.s32.totalorder %s130, 0
    %s133 = sadd.s32 %s132, 1
    %s134 = scalar_select %p131, %s132, %s133
    %p137 = pneg %p131
    %p138 = scmp.eq.s32.totalorder %s10, 1
    %p139 = por %p137, %p138
    %p140 = scmp.ne.s32.totalorder %s132, %s135
    %p141 = scmp.eq.s32.totalorder %s10, 0
    %p142 = por %p140, %p141
    %p143 = scmp.ne.s32.totalorder %s132, %s135
    %p144 = scmp.eq.s32.totalorder %s15, 1
    %p145 = por %p143, %p144
    %p146 = scmp.ne.s32.totalorder %s135, %s136
    %p147 = scmp.eq.s32.totalorder %s15, 0
    %p148 = por %p146, %p147
    %p149 = scmp.ne.s32.totalorder %s135, %s136
    %p150 = scmp.eq.s32.totalorder %s16, 1
    %p151 = por %p149, %p150
    %p153 = scmp.ne.s32.totalorder %s136, %s152
    %p154 = scmp.eq.s32.totalorder %s16, 0
    %p155 = por %p153, %p154
    %p156 = scmp.le.s32.totalorder 1, %s10
    %p157 = scmp.lt.s32.totalorder %s10, 3
    %p158 = pnand %p156, %p157
    %p159 = pneg %p158
    // Predicated region
    $region9: #{model_forward.3} parent=5 // pred_check
      _
    $region10: #{model_forward.3} parent=5 // pred_check_branch
      %161 = sbr.rel (%p158) target = $region12
    $region11: #{model_forward.3} parent=5 // pred_region
      %s162 = ssub.s32 %s10, 1
      // Predicated region
      $region13: #{model_forward.3} parent=11 // pred_check
        %p163 = pneg %p43
      $region14: #{model_forward.3} parent=11 // pred_check_branch
        %165 = sbr.rel (%p163) target = $region16
      $region15: #{model_forward.3} parent=11 // pred_region
        _
      $region16: #{model_forward.3} parent=11 // pred_fallthru
        _
      // Predicated region
      $region17: #{model_forward.3} parent=11 // pred_check
        %p166 = pneg %p64
      $region18: #{model_forward.3} parent=11 // pred_check_branch
        %168 = sbr.rel (%p166) target = $region20
      $region19: #{model_forward.3} parent=11 // pred_region
        _
      $region20: #{model_forward.3} parent=11 // pred_fallthru
        _
    $region12: #{model_forward.3} parent=5 // pred_fallthru
      _
    %p169 = scmp.lt.s32.totalorder %s10, 2
    // Predicated region
    $region21: #{model_forward.3} parent=5 // pred_check
      %p170 = pneg %p169
    $region22: #{model_forward.3} parent=5 // pred_check_branch
      %172 = sbr.rel (%p170) target = $region24
    $region23: #{model_forward.3} parent=5 // pred_region
      // Predicated region
      $region25: #{model_forward.3} parent=23 // pred_check
        %p173 = pneg %p86
      $region26: #{model_forward.3} parent=23 // pred_check_branch
        %175 = sbr.rel (%p173) target = $region28
      $region27: #{model_forward.3} parent=23 // pred_region
        %s176 = smul.u32 3, %s18
        %p177 = scmp.lt.s32.totalorder %s17, 1
        %s178 = scalar_select %p177, %s17, 1
        %p179 = scmp.lt.s32.totalorder %s176, 2
        %s180 = scalar_select %p179, %s176, 2
        %s181 = smul.addr %s178, 3
        %s182 = sadd.s32 %s180, %s181
        %s183 = smul.addr %s182, 4
        %s184 = scalar_lea.vmem %s2, %s183
        %s185 = smul.u32 3, %s18
      $region28: #{model_forward.3} parent=23 // pred_fallthru
        _
      // Predicated region
      $region29: #{model_forward.3} parent=23 // pred_check
        %p186 = pneg %p114
      $region30: #{model_forward.3} parent=23 // pred_check_branch
        %188 = sbr.rel (%p186) target = $region32
      $region31: #{model_forward.3} parent=23 // pred_region
        %s189 = smul.u32 3, %s18
        %p190 = scmp.lt.s32.totalorder %s17, 1
        %s191 = scalar_select %p190, %s17, 1
        %p192 = scmp.lt.s32.totalorder %s189, 2
        %s193 = scalar_select %p192, %s189, 2
        %s194 = smul.addr %s191, 3
        %s195 = sadd.s32 %s193, %s194
        %s196 = smul.addr %s195, 4
        %s197 = scalar_lea.vmem %s3, %s196
        %s198 = smul.u32 3, %s18
      $region32: #{model_forward.3} parent=23 // pred_fallthru
        _
    $region24: #{model_forward.3} parent=5 // pred_fallthru
      _
    %p199 = scmp.le.s32.totalorder 1, %s10
    %p200 = scmp.lt.s32.totalorder %s10, 3
    %p201 = pnand %p199, %p200
    %p202 = pneg %p201
    // Predicated region
    $region33: #{model_forward.3} parent=5 // pred_check
      _
    $region34: #{model_forward.3} parent=5 // pred_check_branch
      %204 = sbr.rel (%p201) target = $region36
    $region35: #{model_forward.3} parent=5 // pred_region
      %s205 = ssub.s32 %s10, 1
      %p206 = pneg %p43
      %p207 = pneg %p40
      %p208 = pneg %p64
      %p209 = pneg %p61
      %s210 = smul.u32 3, %s20
      %p211 = scmp.lt.s32.totalorder %s19, 1
      %s212 = scalar_select %p211, %s19, 1
      %p213 = scmp.lt.s32.totalorder %s210, 2
      %s214 = scalar_select %p213, %s210, 2
      %s215 = smul.addr %s212, 3
      %s216 = sadd.s32 %s214, %s215
      %s217 = smul.addr %s216, 4
      %s218 = scalar_lea.vmem %s2, %s217
      %p219 = pneg %p92
      %p220 = pneg %p89
      %s221 = smul.u32 3, %s20
      %p222 = scmp.lt.s32.totalorder %s19, 1
      %s223 = scalar_select %p222, %s19, 1
      %p224 = scmp.lt.s32.totalorder %s221, 2
      %s225 = scalar_select %p224, %s221, 2
      %s226 = smul.addr %s223, 3
      %s227 = sadd.s32 %s225, %s226
      %s228 = smul.addr %s227, 4
      %s229 = scalar_lea.vmem %s3, %s228
      %p230 = pneg %p120
      %p231 = pneg %p117
      %p232 = pneg %p148
      %p233 = pneg %p145
      %s234 = smul.u32 3, %s20
      %p235 = scmp.lt.s32.totalorder %s19, 1
      %s236 = scalar_select %p235, %s19, 1
      %p237 = scmp.lt.s32.totalorder %s234, 2
      %s238 = scalar_select %p237, %s234, 2
      %s239 = smul.addr %s236, 3
      %s240 = sadd.s32 %s238, %s239
      %s241 = smul.addr %s240, 8
      %s242 = scalar_lea.vmem %s4, %s241
      %s243 = smul.u32 3, %s20
      %p244 = scmp.lt.s32.totalorder %s19, 1
      %s245 = scalar_select %p244, %s19, 1
      %p246 = scmp.lt.s32.totalorder %s243, 2
      %s247 = scalar_select %p246, %s243, 2
      %s248 = smul.addr %s245, 3
      %s249 = sadd.s32 %s247, %s248
      %s250 = smul.addr %s249, 4
      %s251 = scalar_lea.vmem %s2, %s250
      %s252 = smul.u32 3, %s20
      %s253 = smul.u32 3, %s20
      %p254 = scmp.lt.s32.totalorder %s19, 1
      %s255 = scalar_select %p254, %s19, 1
      %p256 = scmp.lt.s32.totalorder %s253, 2
      %s257 = scalar_select %p256, %s253, 2
      %s258 = smul.addr %s255, 3
      %s259 = sadd.s32 %s257, %s258
      %s260 = smul.addr %s259, 4
      %s261 = scalar_lea.vmem %s3, %s260
      %s262 = smul.u32 3, %s20
      %s263 = smul.u32 3, %s20
      %p264 = scmp.lt.s32.totalorder %s19, 1
      %s265 = scalar_select %p264, %s19, 1
      %p266 = scmp.lt.s32.totalorder %s263, 2
      %s267 = scalar_select %p266, %s263, 2
      %s268 = smul.addr %s265, 3
      %s269 = sadd.s32 %s267, %s268
      %s270 = smul.addr %s269, 8
      %s271 = scalar_lea.vmem %s4, %s270
      %s272 = smul.u32 3, %s20
      %v273 = vld [vmem:[%s251] sm:$0x77]
      %v274 = vld [vmem:[%s251 + $0x8] sm:$0x7]
      %v275 = vld [vmem:[%s261] sm:$0x77]
      %v276 = vld [vmem:[%s261 + $0x8] sm:$0x7]
      %v277 = vld [vmem:[%s0] sm:$0xff]
      %v278 = vld [vmem:[%s0 + $0x8] sm:$0xff]
      %v279 = vld [vmem:[%s0 + $0x10] sm:$0xff]
      %s280 = scalar_lea.vmem %s0, 24
      %v281 = vld [vmem:[%s280] sm:$0xff]
      %v282 = vld [vmem:[%s280 + $0x8] sm:$0xff]
      %v283 = vld [vmem:[%s280 + $0x10] sm:$0xff]
      %v286 = vcombine.high %v275, %v275
      %vm287 = vcmask 23552
      %v289 = vsel %vm287, %v281, 0
      %v292 = vsel %vm287, %v282, 0
      %v295 = vsel %vm287, %v283, 0
      %vm297 = vcmask 1042432
      %v298 = vsel %vm297, %v275, 0
      %v300 = vsel %vm297, %v286, 0
      %v302 = vsel %vm297, %v276, 0
      %304 = vmatprep.subr.mxu0 0.0
      %305 = vmatpush1.msra.mxu0 0.0
      %306 = vmatprep.subr.mxu0 0.0
      %307 = vmatpush1.msra.mxu0 0.0
      %308 = vmatprep.subr.mxu0 0.0
      %309 = vmatpush1.msra.mxu0 0.0
      %310 = vmatprep.subr.mxu0 0.0
      %311 = vmatpush1.msra.mxu0 0.0
      %312 = vmatprep.subr.mxu0 0.0
      %313 = vmatpush1.msra.mxu0 0.0
      %314 = vmatprep.subr.mxu0 0.0
      %315 = vmatpush1.msra.mxu0 0.0
      %316 = vmatprep.subr.mxu0 0.0
      %317 = vmatpush1.msra.mxu0 0.0
      %318 = vmatprep.subr.mxu0 0.0
      %319 = vmatpush1.msra.mxu0 0.0
      %320 = vmatprep.subr.mxu0 0.0
      %321 = vmatpush1.msra.mxu0 0.0
      %322 = vmatprep.subr.mxu0 0.0
      %323 = vmatpush1.msra.mxu0 0.0
      %324 = vmatprep.subr.mxu0 0.0
      %325 = vmatpush1.msra.mxu0 0.0
      %326 = vmatprep.subr.mxu0 0.0
      %327 = vmatpush1.msra.mxu0 0.0
      %328 = vmatprep.subr.mxu0 0.0
      %329 = vmatpush1.msra.mxu0 0.0
      %330 = vmatprep.subr.mxu0 0.0
      %331 = vmatpush1.msra.mxu0 0.0
      %332 = vmatprep.subr.mxu0 0.0
      %333 = vmatpush1.msra.mxu0 0.0
      %334 = vmatprep.subr.mxu0 %v300
      %335 = vmatpush1.msra.mxu0 %v298
      %336 = vmatprep.subr.mxu0 0.0
      %337 = vmatpush2.msra.mxu0 0.0
      %338 = vmatprep.subr.mxu0 0.0
      %339 = vmatpush2.msra.mxu0 0.0
      %340 = vmatprep.subr.mxu0 0.0
      %341 = vmatpush2.msra.mxu0 0.0
      %342 = vmatprep.subr.mxu0 0.0
      %343 = vmatpush2.msra.mxu0 0.0
      %344 = vmatprep.subr.mxu0 0.0
      %345 = vmatpush2.msra.mxu0 0.0
      %346 = vmatprep.subr.mxu0 0.0
      %347 = vmatpush2.msra.mxu0 0.0
      %348 = vmatprep.subr.mxu0 0.0
      %349 = vmatpush2.msra.mxu0 0.0
      %350 = vmatprep.subr.mxu0 0.0
      %351 = vmatpush2.msra.mxu0 0.0
      %352 = vmatprep.subr.mxu0 0.0
      %353 = vmatpush2.msra.mxu0 0.0
      %354 = vmatprep.subr.mxu0 0.0
      %355 = vmatpush2.msra.mxu0 0.0
      %356 = vmatprep.subr.mxu0 0.0
      %357 = vmatpush2.msra.mxu0 0.0
      %358 = vmatprep.subr.mxu0 0.0
      %359 = vmatpush2.msra.mxu0 0.0
      %360 = vmatprep.subr.mxu0 0.0
      %361 = vmatpush2.msra.mxu0 0.0
      %362 = vmatprep.subr.mxu0 0.0
      %363 = vmatpush2.msra.mxu0 0.0
      %364 = vmatprep.subr.mxu0 0.0
      %365 = vmatpush2.msra.mxu0 0.0
      %366 = vmatprep.subr.mxu0 0.0
      %367 = vmatpush2.msra.mxu0 0.0
      %368 = vmatprep.mubr.f32.mxu0 0.0
      %369 = vmatmul.mubr.f32.gmra.mxu0 %v289
      %v370 = vpop.f32.mrf.mxu0
      %v371 = vadd.f32 0.0, %v370
      %v372 = vpop.f32.mrf.mxu0
      %v373 = vadd.f32 0.0, %v372
      %374 = vmatprep.mubr.f32.mxu0 0.0
      %375 = vmatmul.mubr.f32.gmra.mxu0 %v292
      %v376 = vpop.f32.mrf.mxu0
      %v377 = vadd.f32 0.0, %v376
      %v378 = vpop.f32.mrf.mxu0
      %v379 = vadd.f32 0.0, %v378
      %380 = vmatprep.mubr.f32.mxu0 0.0
      %381 = vmatmul.mubr.f32.gmra.mxu0 %v295
      %v382 = vpop.f32.mrf.mxu0
      %v383 = vadd.f32 0.0, %v382
      %v384 = vpop.f32.mrf.mxu0
      %v385 = vadd.f32 0.0, %v384
      %386 = vdwg.mxu0
      %387 = vmatprep.subr.mxu0 0.0
      %388 = vmatpush1.msra.mxu0 0.0
      %389 = vmatprep.subr.mxu0 0.0
      %390 = vmatpush1.msra.mxu0 0.0
      %391 = vmatprep.subr.mxu0 0.0
      %392 = vmatpush1.msra.mxu0 0.0
      %393 = vmatprep.subr.mxu0 0.0
      %394 = vmatpush1.msra.mxu0 0.0
      %395 = vmatprep.subr.mxu0 0.0
      %396 = vmatpush1.msra.mxu0 0.0
      %397 = vmatprep.subr.mxu0 0.0
      %398 = vmatpush1.msra.mxu0 0.0
      %399 = vmatprep.subr.mxu0 0.0
      %400 = vmatpush1.msra.mxu0 0.0
      %401 = vmatprep.subr.mxu0 0.0
      %402 = vmatpush1.msra.mxu0 0.0
      %403 = vmatprep.subr.mxu0 0.0
      %404 = vmatpush1.msra.mxu0 0.0
      %405 = vmatprep.subr.mxu0 0.0
      %406 = vmatpush1.msra.mxu0 0.0
      %407 = vmatprep.subr.mxu0 0.0
      %408 = vmatpush1.msra.mxu0 0.0
      %409 = vmatprep.subr.mxu0 0.0
      %410 = vmatpush1.msra.mxu0 0.0
      %411 = vmatprep.subr.mxu0 0.0
      %412 = vmatpush1.msra.mxu0 0.0
      %413 = vmatprep.subr.mxu0 0.0
      %414 = vmatpush1.msra.mxu0 0.0
      %415 = vmatprep.subr.mxu0 0.0
      %416 = vmatpush1.msra.mxu0 0.0
      %417 = vmatprep.subr.mxu0 0.0
      %418 = vmatpush1.msra.mxu0 %v302
      %419 = vmatprep.subr.mxu0 0.0
      %420 = vmatpush2.msra.mxu0 0.0
      %421 = vmatprep.subr.mxu0 0.0
      %422 = vmatpush2.msra.mxu0 0.0
      %423 = vmatprep.subr.mxu0 0.0
      %424 = vmatpush2.msra.mxu0 0.0
      %425 = vmatprep.subr.mxu0 0.0
      %426 = vmatpush2.msra.mxu0 0.0
      %427 = vmatprep.subr.mxu0 0.0
      %428 = vmatpush2.msra.mxu0 0.0
      %429 = vmatprep.subr.mxu0 0.0
      %430 = vmatpush2.msra.mxu0 0.0
      %431 = vmatprep.subr.mxu0 0.0
      %432 = vmatpush2.msra.mxu0 0.0
      %433 = vmatprep.subr.mxu0 0.0
      %434 = vmatpush2.msra.mxu0 0.0
      %435 = vmatprep.subr.mxu0 0.0
      %436 = vmatpush2.msra.mxu0 0.0
      %437 = vmatprep.subr.mxu0 0.0
      %438 = vmatpush2.msra.mxu0 0.0
      %439 = vmatprep.subr.mxu0 0.0
      %440 = vmatpush2.msra.mxu0 0.0
      %441 = vmatprep.subr.mxu0 0.0
      %442 = vmatpush2.msra.mxu0 0.0
      %443 = vmatprep.subr.mxu0 0.0
      %444 = vmatpush2.msra.mxu0 0.0
      %445 = vmatprep.subr.mxu0 0.0
      %446 = vmatpush2.msra.mxu0 0.0
      %447 = vmatprep.subr.mxu0 0.0
      %448 = vmatpush2.msra.mxu0 0.0
      %449 = vmatprep.subr.mxu0 0.0
      %450 = vmatpush2.msra.mxu0 0.0
      %451 = vmatprep.mubr.f32.mxu0 0.0
      %452 = vmatmul.mubr.f32.gmra.mxu0 %v289
      %v453 = vpop.f32.mrf.mxu0
      %v454 = vadd.f32 0.0, %v453
      %v455 = vpop.f32.mrf.mxu0
      %456 = vmatprep.mubr.f32.mxu0 0.0
      %457 = vmatmul.mubr.f32.gmra.mxu0 %v292
      %v458 = vpop.f32.mrf.mxu0
      %v459 = vadd.f32 0.0, %v458
      %v460 = vpop.f32.mrf.mxu0
      %461 = vmatprep.mubr.f32.mxu0 0.0
      %462 = vmatmul.mubr.f32.gmra.mxu0 %v295
      %v463 = vpop.f32.mrf.mxu0
      %v464 = vadd.f32 0.0, %v463
      %v465 = vpop.f32.mrf.mxu0
      %466 = vdwg.mxu0
      %v469 = vcombine.high %v273, %v273
      %v471 = vsel %vm287, %v277, 0
      %v474 = vsel %vm287, %v278, 0
      %v477 = vsel %vm287, %v279, 0
      %v479 = vsel %vm297, %v273, 0
      %v481 = vsel %vm297, %v469, 0
      %v483 = vsel %vm297, %v274, 0
      %485 = vmatprep.subr.mxu0 0.0
      %486 = vmatpush1.msra.mxu0 0.0
      %487 = vmatprep.subr.mxu0 0.0
      %488 = vmatpush1.msra.mxu0 0.0
      %489 = vmatprep.subr.mxu0 0.0
      %490 = vmatpush1.msra.mxu0 0.0
      %491 = vmatprep.subr.mxu0 0.0
      %492 = vmatpush1.msra.mxu0 0.0
      %493 = vmatprep.subr.mxu0 0.0
      %494 = vmatpush1.msra.mxu0 0.0
      %495 = vmatprep.subr.mxu0 0.0
      %496 = vmatpush1.msra.mxu0 0.0
      %497 = vmatprep.subr.mxu0 0.0
      %498 = vmatpush1.msra.mxu0 0.0
      %499 = vmatprep.subr.mxu0 0.0
      %500 = vmatpush1.msra.mxu0 0.0
      %501 = vmatprep.subr.mxu0 0.0
      %502 = vmatpush1.msra.mxu0 0.0
      %503 = vmatprep.subr.mxu0 0.0
      %504 = vmatpush1.msra.mxu0 0.0
      %505 = vmatprep.subr.mxu0 0.0
      %506 = vmatpush1.msra.mxu0 0.0
      %507 = vmatprep.subr.mxu0 0.0
      %508 = vmatpush1.msra.mxu0 0.0
      %509 = vmatprep.subr.mxu0 0.0
      %510 = vmatpush1.msra.mxu0 0.0
      %511 = vmatprep.subr.mxu0 0.0
      %512 = vmatpush1.msra.mxu0 0.0
      %513 = vmatprep.subr.mxu0 0.0
      %514 = vmatpush1.msra.mxu0 0.0
      %515 = vmatprep.subr.mxu0 %v481
      %516 = vmatpush1.msra.mxu0 %v479
      %517 = vmatprep.subr.mxu0 0.0
      %518 = vmatpush2.msra.mxu0 0.0
      %519 = vmatprep.subr.mxu0 0.0
      %520 = vmatpush2.msra.mxu0 0.0
      %521 = vmatprep.subr.mxu0 0.0
      %522 = vmatpush2.msra.mxu0 0.0
      %523 = vmatprep.subr.mxu0 0.0
      %524 = vmatpush2.msra.mxu0 0.0
      %525 = vmatprep.subr.mxu0 0.0
      %526 = vmatpush2.msra.mxu0 0.0
      %527 = vmatprep.subr.mxu0 0.0
      %528 = vmatpush2.msra.mxu0 0.0
      %529 = vmatprep.subr.mxu0 0.0
      %530 = vmatpush2.msra.mxu0 0.0
      %531 = vmatprep.subr.mxu0 0.0
      %532 = vmatpush2.msra.mxu0 0.0
      %533 = vmatprep.subr.mxu0 0.0
      %534 = vmatpush2.msra.mxu0 0.0
      %535 = vmatprep.subr.mxu0 0.0
      %536 = vmatpush2.msra.mxu0 0.0
      %537 = vmatprep.subr.mxu0 0.0
      %538 = vmatpush2.msra.mxu0 0.0
      %539 = vmatprep.subr.mxu0 0.0
      %540 = vmatpush2.msra.mxu0 0.0
      %541 = vmatprep.subr.mxu0 0.0
      %542 = vmatpush2.msra.mxu0 0.0
      %543 = vmatprep.subr.mxu0 0.0
      %544 = vmatpush2.msra.mxu0 0.0
      %545 = vmatprep.subr.mxu0 0.0
      %546 = vmatpush2.msra.mxu0 0.0
      %547 = vmatprep.subr.mxu0 0.0
      %548 = vmatpush2.msra.mxu0 0.0
      %549 = vmatprep.mubr.f32.mxu0 0.0
      %550 = vmatmul.mubr.f32.gmra.mxu0 %v471
      %v551 = vpop.f32.mrf.mxu0
      %v552 = vadd.f32 %v371, %v551
      %v553 = vpop.f32.mrf.mxu0
      %v554 = vadd.f32 %v373, %v553
      %555 = vmatprep.mubr.f32.mxu0 0.0
      %556 = vmatmul.mubr.f32.gmra.mxu0 %v474
      %v557 = vpop.f32.mrf.mxu0
      %v558 = vadd.f32 %v377, %v557
      %v559 = vpop.f32.mrf.mxu0
      %v560 = vadd.f32 %v379, %v559
      %561 = vmatprep.mubr.f32.mxu0 0.0
      %562 = vmatmul.mubr.f32.gmra.mxu0 %v477
      %v563 = vpop.f32.mrf.mxu0
      %v564 = vadd.f32 %v383, %v563
      %v565 = vpop.f32.mrf.mxu0
      %v566 = vadd.f32 %v385, %v565
      %567 = vdwg.mxu0
      %568 = vmatprep.subr.mxu0 0.0
      %569 = vmatpush1.msra.mxu0 0.0
      %570 = vmatprep.subr.mxu0 0.0
      %571 = vmatpush1.msra.mxu0 0.0
      %572 = vmatprep.subr.mxu0 0.0
      %573 = vmatpush1.msra.mxu0 0.0
      %574 = vmatprep.subr.mxu0 0.0
      %575 = vmatpush1.msra.mxu0 0.0
      %576 = vmatprep.subr.mxu0 0.0
      %577 = vmatpush1.msra.mxu0 0.0
      %578 = vmatprep.subr.mxu0 0.0
      %579 = vmatpush1.msra.mxu0 0.0
      %580 = vmatprep.subr.mxu0 0.0
      %581 = vmatpush1.msra.mxu0 0.0
      %582 = vmatprep.subr.mxu0 0.0
      %583 = vmatpush1.msra.mxu0 0.0
      %584 = vmatprep.subr.mxu0 0.0
      %585 = vmatpush1.msra.mxu0 0.0
      %586 = vmatprep.subr.mxu0 0.0
      %587 = vmatpush1.msra.mxu0 0.0
      %588 = vmatprep.subr.mxu0 0.0
      %589 = vmatpush1.msra.mxu0 0.0
      %590 = vmatprep.subr.mxu0 0.0
      %591 = vmatpush1.msra.mxu0 0.0
      %592 = vmatprep.subr.mxu0 0.0
      %593 = vmatpush1.msra.mxu0 0.0
      %594 = vmatprep.subr.mxu0 0.0
      %595 = vmatpush1.msra.mxu0 0.0
      %596 = vmatprep.subr.mxu0 0.0
      %597 = vmatpush1.msra.mxu0 0.0
      %598 = vmatprep.subr.mxu0 0.0
      %599 = vmatpush1.msra.mxu0 %v483
      %600 = vmatprep.subr.mxu0 0.0
      %601 = vmatpush2.msra.mxu0 0.0
      %602 = vmatprep.subr.mxu0 0.0
      %603 = vmatpush2.msra.mxu0 0.0
      %604 = vmatprep.subr.mxu0 0.0
      %605 = vmatpush2.msra.mxu0 0.0
      %606 = vmatprep.subr.mxu0 0.0
      %607 = vmatpush2.msra.mxu0 0.0
      %608 = vmatprep.subr.mxu0 0.0
      %609 = vmatpush2.msra.mxu0 0.0
      %610 = vmatprep.subr.mxu0 0.0
      %611 = vmatpush2.msra.mxu0 0.0
      %612 = vmatprep.subr.mxu0 0.0
      %613 = vmatpush2.msra.mxu0 0.0
      %614 = vmatprep.subr.mxu0 0.0
      %615 = vmatpush2.msra.mxu0 0.0
      %616 = vmatprep.subr.mxu0 0.0
      %617 = vmatpush2.msra.mxu0 0.0
      %618 = vmatprep.subr.mxu0 0.0
      %619 = vmatpush2.msra.mxu0 0.0
      %620 = vmatprep.subr.mxu0 0.0
      %621 = vmatpush2.msra.mxu0 0.0
      %622 = vmatprep.subr.mxu0 0.0
      %623 = vmatpush2.msra.mxu0 0.0
      %624 = vmatprep.subr.mxu0 0.0
      %625 = vmatpush2.msra.mxu0 0.0
      %626 = vmatprep.subr.mxu0 0.0
      %627 = vmatpush2.msra.mxu0 0.0
      %628 = vmatprep.subr.mxu0 0.0
      %629 = vmatpush2.msra.mxu0 0.0
      %630 = vmatprep.subr.mxu0 0.0
      %631 = vmatpush2.msra.mxu0 0.0
      %632 = vmatprep.mubr.f32.mxu0 0.0
      %633 = vmatmul.mubr.f32.gmra.mxu0 %v471
      %v634 = vpop.f32.mrf.mxu0
      %v635 = vadd.f32 %v454, %v634
      %v636 = vpop.f32.mrf.mxu0
      %637 = vmatprep.mubr.f32.mxu0 0.0
      %638 = vmatmul.mubr.f32.gmra.mxu0 %v474
      %v639 = vpop.f32.mrf.mxu0
      %v640 = vadd.f32 %v459, %v639
      %v641 = vpop.f32.mrf.mxu0
      %642 = vmatprep.mubr.f32.mxu0 0.0
      %643 = vmatmul.mubr.f32.gmra.mxu0 %v477
      %v644 = vpop.f32.mrf.mxu0
      %v645 = vadd.f32 %v464, %v644
      %v646 = vpop.f32.mrf.mxu0
      %647 = vdwg.mxu0
      %v648 = vld [vmem:[%s1] sm:$0xff]
      %v649 = vld [vmem:[%s1 + $0x8] sm:$0xff]
      %v650 = vld [vmem:[%s1 + $0x10] sm:$0xff]
      %652 = vset.pattern.permute.xlu0 0
      %653 = vperm.xlu0 %652, %v648
      %v654 = vpop.permute.xlu0 %653
      %657 = vset.pattern.permute.xlu0 0
      %658 = vperm.xlu0 %657, %v649
      %v659 = vpop.permute.xlu0 %658
      %662 = vset.pattern.permute.xlu0 0
      %663 = vperm.xlu0 %662, %v650
      %v664 = vpop.permute.xlu0 %663
      %v666 = vadd.f32 %v552, %v654
      %v667 = vadd.f32 %v554, %v654
      %v668 = vadd.f32 %v635, %v654
      %v669 = vadd.f32 %v558, %v659
      %v670 = vadd.f32 %v560, %v659
      %v671 = vadd.f32 %v640, %v659
      %v672 = vadd.f32 %v564, %v664
      %v673 = vadd.f32 %v566, %v664
      %v674 = vadd.f32 %v645, %v664
      %v675 = vmul.f32 %v666, %v669
      %v676 = vmul.f32 %v667, %v670
      %v677 = vmul.f32 %v668, %v671
      %v678 = vadd.f32 %v675, %v672
      %v679 = vadd.f32 %v676, %v673
      %v680 = vadd.f32 %v677, %v674
      %681 = vst [vmem:[%s271] sm:$0xff] %v678
      %682 = vst [vmem:[%s271 + $0x8] sm:$0xff] %v679
      %683 = vst [vmem:[%s271 + $0x10] sm:$0xff] %v680
      %s684 = smul.u32 3, %s20
      %p685 = scmp.lt.s32.totalorder %s19, 1
      %s686 = scalar_select %p685, %s19, 1
      %p687 = scmp.lt.s32.totalorder %s684, 2
      %s688 = scalar_select %p687, %s684, 2
      %s689 = smul.addr %s686, 3
      %s690 = sadd.s32 %s688, %s689
      %s691 = smul.addr %s690, 8
      %s692 = scalar_lea.vmem %s4, %s691
      // Predicated region
      $region37: #{model_forward.3} parent=35 // pred_check
        %p693 = pneg %p145
      $region38: #{model_forward.3} parent=35 // pred_check_branch
        %695 = sbr.rel (%p693) target = $region40
      $region39: #{model_forward.3} parent=35 // pred_region
        %s696 = smul.u32 3, %s20
      $region40: #{model_forward.3} parent=35 // pred_fallthru
        _
    $region36: #{model_forward.3} parent=5 // pred_fallthru
      _
    %p697 = scmp.le.s32.totalorder 2, %s10
    // Predicated region
    $region41: #{model_forward.3} parent=5 // pred_check
      %p698 = pneg %p697
    $region42: #{model_forward.3} parent=5 // pred_check_branch
      %700 = sbr.rel (%p698) target = $region44
    $region43: #{model_forward.3} parent=5 // pred_region
      %s701 = ssub.s32 %s10, 2
      // Predicated region
      $region45: #{model_forward.3} parent=43 // pred_check
        %p702 = pneg %p151
      $region46: #{model_forward.3} parent=43 // pred_check_branch
        %704 = sbr.rel (%p702) target = $region48
      $region47: #{model_forward.3} parent=43 // pred_region
        %s705 = smul.u32 3, %s22
        %p706 = scmp.lt.s32.totalorder %s21, 1
        %s707 = scalar_select %p706, %s21, 1
        %p708 = scmp.lt.s32.totalorder %s705, 2
        %s709 = scalar_select %p708, %s705, 2
        %s710 = smul.addr %s707, 3
        %s711 = sadd.s32 %s709, %s710
        %s712 = smul.addr %s711, 8
        %s713 = scalar_lea.vmem %s4, %s712
      $region48: #{model_forward.3} parent=43 // pred_fallthru
        _
    $region44: #{model_forward.3} parent=5 // pred_fallthru
      _
  $region6: #{model_forward.3} parent=0 // loop_footer
    %s14 = sadd.s32 1, %s10
  $region7: #{model_forward.3} parent=0 // loop_footer_branch
    %9 = sbr.rel target = $region3
  $region8: #{model_forward.3} parent=0 // loop_exit
    _

</llo_original>
